<compile_context>
chip_gen: v5e
topology: v5e:2x2
jax: 0.10.0
libtpu: 0.0.40
codegen_flags: <defaults>
</compile_context>

<pallas_src>
import math
import functools

import jax
import jax.numpy as jnp
from jax.experimental import pallas as pl
from jax.experimental.pallas import tpu as pltpu


def mha_kernel(x_ref, wqkv_ref, bqkv_ref, wo_ref, bo_ref, o_ref, *,
               num_heads, compute_dtype):
    bt, N, E = x_ref.shape           # x block: (b_tile, N, E)
    H = num_heads
    D = E // H
    R = bt * N                       # rows fed to the GEMMs
    G = bt * H                       # head-batch size for attention

    x = x_ref[...].reshape(R, E).astype(compute_dtype)                 # (R, E)

    # Fused QKV projection: one (R, E) @ (E, 3E) MXU GEMM.
    # The 1/sqrt(E) attention scale is already folded into the Q columns.
    qkv = jnp.dot(x, wqkv_ref[...].astype(compute_dtype),
                  preferred_element_type=jnp.float32) + bqkv_ref[...]  # (R, 3E)
    q = qkv[:, 0 * E:1 * E]
    k = qkv[:, 1 * E:2 * E]
    v = qkv[:, 2 * E:3 * E]

    # Head split: gather each (batch-in-tile, head) (N, D) tile onto a single
    # leading batch axis so attention is two head-batched MXU calls instead of
    # a per-head matmul loop.  (Some relayout is unavoidable at D < 128; for
    # large head dims this would be a pltpu.einshape / outside-kernel split.)
    def to_heads(t):
        parts = []
        for b in range(bt):
            for h in range(H):
                parts.append(t[b * N:(b + 1) * N, h * D:(h + 1) * D])
        return jnp.stack(parts, axis=0).astype(compute_dtype)          # (G, N, D)

    qh, kh, vh = to_heads(q), to_heads(k), to_heads(v)

    # energy: 'bhqd, bhkd -> bhqk' (scale pre-folded into Q).
    energy = jnp.einsum("gqd,gkd->gqk", qh, kh,
                        preferred_element_type=jnp.float32)            # (G, N, N)
    energy = energy - jnp.max(energy, axis=-1, keepdims=True)
    p = jnp.exp(energy)
    att = p * pl.reciprocal(jnp.sum(p, axis=-1, keepdims=True), approx=True)
    # att_drop: identity (eval mode).

    # 'bhal, bhlv -> bhav'
    ctx = jnp.einsum("gqk,gkd->gqd", att.astype(compute_dtype), vh,
                     preferred_element_type=jnp.float32)               # (G, N, D)

    # Merge heads 'b h n d -> b n (h d)' and do ONE (R, E) @ (E, E) output GEMM.
    rows = []
    for b in range(bt):
        rows.append(jnp.concatenate([ctx[b * H + h] for h in range(H)], axis=-1))
    ctx2 = rows[0] if bt == 1 else jnp.concatenate(rows, axis=0)        # (R, E)

    out = jnp.dot(ctx2.astype(compute_dtype), wo_ref[...].astype(compute_dtype),
                  preferred_element_type=jnp.float32) + bo_ref[...]
    # TODO(synk): E < 128 makes this a masked (non lane-dense) store; pad E to
    # 128 outside the kernel if this layer ever becomes store-bound.
    o_ref[...] = out.reshape(bt, N, E).astype(o_ref.dtype)


def _pick_b_tile(B, N):
    """Largest divisor of B that (a) keeps >=2 grid slices when B >= 2 (so both
    v7x TensorCores get work) and (b) feeds roughly >=128 rows per GEMM."""
    max_rows_tile = max(1, -(-128 // max(N, 1)))
    best = 1
    for cand in range(1, B + 1):
        if B % cand != 0:
            continue
        if cand > max_rows_tile:
            continue
        if B >= 2 and B // cand < 2:
            continue
        best = cand
    return best


def multi_head_attention(x, fused, *, num_heads, b_tile=None,
                         compute_dtype=jnp.float32):
    """x: (B, N, E).  fused: dict from fuse_params (pre-transposed, QKV-fused).

    compute_dtype=jnp.bfloat16 enables bf16 MXU inputs (f32 accumulation) for
    v6e/v7x; validate with a looser tolerance in that case.
    """
    B, N, E = x.shape
    if b_tile is None:
        b_tile = _pick_b_tile(B, N)
    assert B % b_tile == 0, (B, b_tile)

    kernel = functools.partial(mha_kernel, num_heads=num_heads,
                               compute_dtype=compute_dtype)

    return pl.pallas_call(
        kernel,
        out_shape=jax.ShapeDtypeStruct((B, N, E), x.dtype),
        grid_spec=pltpu.PrefetchScalarGridSpec(
            num_scalar_prefetch=0,
            grid=(B // b_tile,),
            in_specs=[
                pl.BlockSpec((b_tile, N, E), lambda i: (i, 0, 0)),   # x
                pl.BlockSpec((E, 3 * E), lambda i: (0, 0)),          # fused Wqkv
                pl.BlockSpec((1, 3 * E), lambda i: (0, 0)),          # fused bqkv
                pl.BlockSpec((E, E), lambda i: (0, 0)),              # Wo
                pl.BlockSpec((1, E), lambda i: (0, 0)),              # bo
            ],
            out_specs=pl.BlockSpec((b_tile, N, E), lambda i: (i, 0, 0)),
        ),
        compiler_params=pltpu.CompilerParams(
            dimension_semantics=("parallel",)),
        # NOTE: at realistic E on v7x (64 MiB VMEM) also set vmem_limit_bytes
        # and single-buffer the grid-invariant weight blocks.
    )(x, fused["w_qkv"], fused["b_qkv"], fused["wo"], fused["bo"])


def init_params(key, emb_size):
    """Deterministic synthetic parameters. Weights stored as (E_in, E_out),
    i.e. pre-transposed relative to nn.Linear so y = x @ W + b."""
    ks = jax.random.split(key, 8)
    bound = 1.0 / math.sqrt(emb_size)
    def w(k):
        return jax.random.uniform(k, (emb_size, emb_size), jnp.float32,
                                  minval=-bound, maxval=bound)
    def b(k):
        return jax.random.uniform(k, (1, emb_size), jnp.float32,
                                  minval=-bound, maxval=bound)
    return {
        "wq": w(ks[0]), "bq": b(ks[1]),
        "wk": w(ks[2]), "bk": b(ks[3]),
        "wv": w(ks[4]), "bv": b(ks[5]),
        "wo": w(ks[6]), "bo": b(ks[7]),
    }


def fuse_params(params, emb_size):
    """One-time parameter prep (not per-call work): concatenate Wq|Wk|Wv into
    (E, 3E) and fold the 1/sqrt(emb_size) attention scaling into the Q columns
    (weights and bias) so the kernel never multiplies by it."""
    inv_scale = 1.0 / math.sqrt(float(emb_size))
    w_qkv = jnp.concatenate(
        [params["wq"] * inv_scale, params["wk"], params["wv"]], axis=1)
    b_qkv = jnp.concatenate(
        [params["bq"] * inv_scale, params["bk"], params["bv"]], axis=1)
    return {"w_qkv": w_qkv, "b_qkv": b_qkv,
            "wo": params["wo"], "bo": params["bo"]}


def reference_mha(x, params, *, num_heads):
    """Pure-JAX reference mirroring the PyTorch forward (eval mode, mask=None)."""
    B, N, E = x.shape
    D = E // num_heads
    q = x @ params["wq"] + params["bq"][0]
    k = x @ params["wk"] + params["bk"][0]
    v = x @ params["wv"] + params["bv"][0]
    def split(t):  # b n (h d) -> b h n d
        return t.reshape(B, N, num_heads, D).transpose(0, 2, 1, 3)
    q, k, v = split(q), split(k), split(v)
    energy = jnp.einsum("bhqd,bhkd->bhqk", q, k)
    att = jax.nn.softmax(energy / math.sqrt(float(E)), axis=-1)
    out = jnp.einsum("bhal,bhlv->bhav", att, v)
    out = out.transpose(0, 2, 1, 3).reshape(B, N, E)
    return out @ params["wo"] + params["bo"][0]


if __name__ == "__main__":
    B, N, E, H = 2, 8, 32, 4   # batch, seq, emb_size, num_heads

    key = jax.random.PRNGKey(0)
    kx, kp = jax.random.split(key)
    x = jax.random.normal(kx, (B, N, E), dtype=jnp.float32)
    params = init_params(kp, E)
    fused = fuse_params(params, E)

    out = multi_head_attention(x, fused, num_heads=H)
    out = jax.block_until_ready(out)

    ref = reference_mha(x, params, num_heads=H)
    assert out.shape == (B, N, E)
    max_err = float(jnp.max(jnp.abs(out - ref)))
    # Slightly looser tolerance because the softmax denominator uses the
    # approximate (EUP) reciprocal; still far tighter than any real bug.
    assert max_err < 5e-3, max_err

    print("KERNEL_OK")
</pallas_src>

<mosaic_0001>
module attributes {stable_mosaic.version = 11 : i64} {
  func.func @mha_kernel(%arg0: i32, %arg1: memref<1x8x32xf32, #tpu.memory_space<vmem>>, %arg2: memref<32x96xf32, #tpu.memory_space<vmem>>, %arg3: memref<1x96xf32, #tpu.memory_space<vmem>>, %arg4: memref<32x32xf32, #tpu.memory_space<vmem>>, %arg5: memref<1x32xf32, #tpu.memory_space<vmem>>, %arg6: memref<1x8x32xf32, #tpu.memory_space<vmem>>) attributes {dimension_semantics = [#tpu.dimension_semantics<parallel>], iteration_bounds = array<i64: 2>, scalar_prefetch = 0 : i64, scratch_operands = 0 : i64, tpu.core_type = #tpu.core_type<tc>, window_params = [{transform_indices = @transform_0, window_bounds = array<i64: 1, 8, 32>}, {pipeline_mode = #tpu.pipeline_mode<synchronous>, transform_indices = @transform_1, window_bounds = array<i64: 32, 96>}, {pipeline_mode = #tpu.pipeline_mode<synchronous>, transform_indices = @transform_2, window_bounds = array<i64: 1, 96>}, {pipeline_mode = #tpu.pipeline_mode<synchronous>, transform_indices = @transform_3, window_bounds = array<i64: 32, 32>}, {pipeline_mode = #tpu.pipeline_mode<synchronous>, transform_indices = @transform_4, window_bounds = array<i64: 1, 32>}, {transform_indices = @transform_5, window_bounds = array<i64: 1, 8, 32>}]} {
    %c0 = arith.constant 0 : index
    %c0_0 = arith.constant 0 : index
    %c0_1 = arith.constant 0 : index
    %0 = vector.load %arg1[%c0, %c0_0, %c0_1] : memref<1x8x32xf32, #tpu.memory_space<vmem>>, vector<1x8x32xf32>
    %1 = vector.shape_cast %0 : vector<1x8x32xf32> to vector<8x32xf32>
    %c0_2 = arith.constant 0 : index
    %c0_3 = arith.constant 0 : index
    %2 = vector.load %arg2[%c0_2, %c0_3] : memref<32x96xf32, #tpu.memory_space<vmem>>, vector<32x96xf32>
    %cst = arith.constant dense<0.000000e+00> : vector<8x96xf32>
    %3 = tpu.matmul %1, %2, %cst {dimension_numbers = #tpu.dot_dimension_numbers<[1], [0], [0], [1], [0, 0, 1, 1], [], []>} : vector<8x32xf32>, vector<32x96xf32>, vector<8x96xf32> -> vector<8x96xf32>
    %c0_4 = arith.constant 0 : index
    %c0_5 = arith.constant 0 : index
    %4 = vector.load %arg3[%c0_4, %c0_5] : memref<1x96xf32, #tpu.memory_space<vmem>>, vector<1x96xf32>
    %5 = vector.broadcast %4 : vector<1x96xf32> to vector<8x96xf32>
    %6 = arith.addf %3, %5 : vector<8x96xf32>
    %7 = vector.extract_strided_slice %6 {offsets = [0, 0], sizes = [8, 32], strides = [1, 1]} : vector<8x96xf32> to vector<8x32xf32>
    %8 = vector.extract_strided_slice %6 {offsets = [0, 32], sizes = [8, 32], strides = [1, 1]} : vector<8x96xf32> to vector<8x32xf32>
    %9 = vector.extract_strided_slice %6 {offsets = [0, 64], sizes = [8, 32], strides = [1, 1]} : vector<8x96xf32> to vector<8x32xf32>
    %10 = vector.extract_strided_slice %7 {offsets = [0, 0], sizes = [8, 8], strides = [1, 1]} : vector<8x32xf32> to vector<8x8xf32>
    %11 = vector.extract_strided_slice %7 {offsets = [0, 8], sizes = [8, 8], strides = [1, 1]} : vector<8x32xf32> to vector<8x8xf32>
    %12 = vector.extract_strided_slice %7 {offsets = [0, 16], sizes = [8, 8], strides = [1, 1]} : vector<8x32xf32> to vector<8x8xf32>
    %13 = vector.extract_strided_slice %7 {offsets = [0, 24], sizes = [8, 8], strides = [1, 1]} : vector<8x32xf32> to vector<8x8xf32>
    %14 = vector.shape_cast %10 : vector<8x8xf32> to vector<1x8x8xf32>
    %15 = vector.shape_cast %11 : vector<8x8xf32> to vector<1x8x8xf32>
    %16 = vector.shape_cast %12 : vector<8x8xf32> to vector<1x8x8xf32>
    %17 = vector.shape_cast %13 : vector<8x8xf32> to vector<1x8x8xf32>
    %18 = tpu.concatenate %14, %15, %16, %17 in 0 : vector<1x8x8xf32>, vector<1x8x8xf32>, vector<1x8x8xf32>, vector<1x8x8xf32> -> vector<4x8x8xf32>
    %19 = vector.extract_strided_slice %8 {offsets = [0, 0], sizes = [8, 8], strides = [1, 1]} : vector<8x32xf32> to vector<8x8xf32>
    %20 = vector.extract_strided_slice %8 {offsets = [0, 8], sizes = [8, 8], strides = [1, 1]} : vector<8x32xf32> to vector<8x8xf32>
    %21 = vector.extract_strided_slice %8 {offsets = [0, 16], sizes = [8, 8], strides = [1, 1]} : vector<8x32xf32> to vector<8x8xf32>
    %22 = vector.extract_strided_slice %8 {offsets = [0, 24], sizes = [8, 8], strides = [1, 1]} : vector<8x32xf32> to vector<8x8xf32>
    %23 = vector.shape_cast %19 : vector<8x8xf32> to vector<1x8x8xf32>
    %24 = vector.shape_cast %20 : vector<8x8xf32> to vector<1x8x8xf32>
    %25 = vector.shape_cast %21 : vector<8x8xf32> to vector<1x8x8xf32>
    %26 = vector.shape_cast %22 : vector<8x8xf32> to vector<1x8x8xf32>
    %27 = tpu.concatenate %23, %24, %25, %26 in 0 : vector<1x8x8xf32>, vector<1x8x8xf32>, vector<1x8x8xf32>, vector<1x8x8xf32> -> vector<4x8x8xf32>
    %28 = vector.extract_strided_slice %9 {offsets = [0, 0], sizes = [8, 8], strides = [1, 1]} : vector<8x32xf32> to vector<8x8xf32>
    %29 = vector.extract_strided_slice %9 {offsets = [0, 8], sizes = [8, 8], strides = [1, 1]} : vector<8x32xf32> to vector<8x8xf32>
    %30 = vector.extract_strided_slice %9 {offsets = [0, 16], sizes = [8, 8], strides = [1, 1]} : vector<8x32xf32> to vector<8x8xf32>
    %31 = vector.extract_strided_slice %9 {offsets = [0, 24], sizes = [8, 8], strides = [1, 1]} : vector<8x32xf32> to vector<8x8xf32>
    %32 = vector.shape_cast %28 : vector<8x8xf32> to vector<1x8x8xf32>
    %33 = vector.shape_cast %29 : vector<8x8xf32> to vector<1x8x8xf32>
    %34 = vector.shape_cast %30 : vector<8x8xf32> to vector<1x8x8xf32>
    %35 = vector.shape_cast %31 : vector<8x8xf32> to vector<1x8x8xf32>
    %36 = tpu.concatenate %32, %33, %34, %35 in 0 : vector<1x8x8xf32>, vector<1x8x8xf32>, vector<1x8x8xf32>, vector<1x8x8xf32> -> vector<4x8x8xf32>
    "tpu.trace_start"() <{level = 10 : i32, message = "gqd,gkd->gqk"}> : () -> ()
    %cst_6 = arith.constant dense<0.000000e+00> : vector<4x8x8xf32>
    %37 = tpu.matmul %18, %27, %cst_6 {dimension_numbers = #tpu.dot_dimension_numbers<[2], [2], [1], [1], [0, 0, 0, 1, 1, 1], [0], [0]>} : vector<4x8x8xf32>, vector<4x8x8xf32>, vector<4x8x8xf32> -> vector<4x8x8xf32>
    "tpu.trace_stop"() : () -> ()
    %cst_7 = arith.constant dense<0xFF800000> : vector<4x8xf32>
    %38 = vector.multi_reduction <maximumf>, %37, %cst_7 [2] : vector<4x8x8xf32> to vector<4x8xf32>
    %39 = vector.shape_cast %38 : vector<4x8xf32> to vector<4x8x1xf32>
    %40 = vector.broadcast %39 : vector<4x8x1xf32> to vector<4x8x8xf32>
    %41 = arith.subf %37, %40 : vector<4x8x8xf32>
    %42 = math.exp %41 : vector<4x8x8xf32>
    %cst_8 = arith.constant dense<0.000000e+00> : vector<4x8xf32>
    %43 = vector.multi_reduction <add>, %42, %cst_8 [2] : vector<4x8x8xf32> to vector<4x8xf32>
    %44 = vector.shape_cast %43 : vector<4x8xf32> to vector<4x8x1xf32>
    %45 = tpu.reciprocal %44 {approx = true} : vector<4x8x1xf32> -> vector<4x8x1xf32>
    %46 = vector.broadcast %45 : vector<4x8x1xf32> to vector<4x8x8xf32>
    %47 = arith.mulf %42, %46 : vector<4x8x8xf32>
    "tpu.trace_start"() <{level = 10 : i32, message = "gqk,gkd->gqd"}> : () -> ()
    %cst_9 = arith.constant dense<0.000000e+00> : vector<4x8x8xf32>
    %48 = tpu.matmul %47, %36, %cst_9 {dimension_numbers = #tpu.dot_dimension_numbers<[2], [1], [1], [2], [0, 0, 0, 1, 1, 2], [0], [0]>} : vector<4x8x8xf32>, vector<4x8x8xf32>, vector<4x8x8xf32> -> vector<4x8x8xf32>
    "tpu.trace_stop"() : () -> ()
    %49 = vector.extract_strided_slice %48 {offsets = [0, 0, 0], sizes = [1, 8, 8], strides = [1, 1, 1]} : vector<4x8x8xf32> to vector<1x8x8xf32>
    %50 = vector.shape_cast %49 : vector<1x8x8xf32> to vector<8x8xf32>
    %51 = vector.extract_strided_slice %48 {offsets = [1, 0, 0], sizes = [1, 8, 8], strides = [1, 1, 1]} : vector<4x8x8xf32> to vector<1x8x8xf32>
    %52 = vector.shape_cast %51 : vector<1x8x8xf32> to vector<8x8xf32>
    %53 = vector.extract_strided_slice %48 {offsets = [2, 0, 0], sizes = [1, 8, 8], strides = [1, 1, 1]} : vector<4x8x8xf32> to vector<1x8x8xf32>
    %54 = vector.shape_cast %53 : vector<1x8x8xf32> to vector<8x8xf32>
    %55 = vector.extract_strided_slice %48 {offsets = [3, 0, 0], sizes = [1, 8, 8], strides = [1, 1, 1]} : vector<4x8x8xf32> to vector<1x8x8xf32>
    %56 = vector.shape_cast %55 : vector<1x8x8xf32> to vector<8x8xf32>
    %57 = tpu.concatenate %50, %52, %54, %56 in 1 : vector<8x8xf32>, vector<8x8xf32>, vector<8x8xf32>, vector<8x8xf32> -> vector<8x32xf32>
    %c0_10 = arith.constant 0 : index
    %c0_11 = arith.constant 0 : index
    %58 = vector.load %arg4[%c0_10, %c0_11] : memref<32x32xf32, #tpu.memory_space<vmem>>, vector<32x32xf32>
    %cst_12 = arith.constant dense<0.000000e+00> : vector<8x32xf32>
    %59 = tpu.matmul %57, %58, %cst_12 {dimension_numbers = #tpu.dot_dimension_numbers<[1], [0], [0], [1], [0, 0, 1, 1], [], []>} : vector<8x32xf32>, vector<32x32xf32>, vector<8x32xf32> -> vector<8x32xf32>
    %c0_13 = arith.constant 0 : index
    %c0_14 = arith.constant 0 : index
    %60 = vector.load %arg5[%c0_13, %c0_14] : memref<1x32xf32, #tpu.memory_space<vmem>>, vector<1x32xf32>
    %61 = vector.broadcast %60 : vector<1x32xf32> to vector<8x32xf32>
    %62 = arith.addf %59, %61 : vector<8x32xf32>
    %63 = vector.shape_cast %62 : vector<8x32xf32> to vector<1x8x32xf32>
    %c0_15 = arith.constant 0 : index
    %c0_16 = arith.constant 0 : index
    %c0_17 = arith.constant 0 : index
    %64 = vector.load %arg6[%c0_15, %c0_16, %c0_17] : memref<1x8x32xf32, #tpu.memory_space<vmem>>, vector<1x8x32xf32>
    tpu.vector_store %arg6[%c0_15, %c0_16, %c0_17], %63 {strides = array<i32>} : memref<1x8x32xf32, #tpu.memory_space<vmem>>, vector<1x8x32xf32>,
    return
  }
  func.func @transform_0(%arg0: i32) -> (i32, i32, i32) {
    %c0_i32 = arith.constant 0 : i32
    %c0_i32_0 = arith.constant 0 : i32
    %c0_i32_1 = arith.constant 0 : i32
    return %arg0, %c0_i32, %c0_i32_0 : i32, i32, i32
  }
  func.func @transform_1(%arg0: i32) -> (i32, i32) {
    %c0_i32 = arith.constant 0 : i32
    %c0_i32_0 = arith.constant 0 : i32
    %c0_i32_1 = arith.constant 0 : i32
    return %c0_i32, %c0_i32_0 : i32, i32
  }
  func.func @transform_2(%arg0: i32) -> (i32, i32) {
    %c0_i32 = arith.constant 0 : i32
    %c0_i32_0 = arith.constant 0 : i32
    %c0_i32_1 = arith.constant 0 : i32
    return %c0_i32, %c0_i32_0 : i32, i32
  }
  func.func @transform_3(%arg0: i32) -> (i32, i32) {
    %c0_i32 = arith.constant 0 : i32
    %c0_i32_0 = arith.constant 0 : i32
    %c0_i32_1 = arith.constant 0 : i32
    return %c0_i32, %c0_i32_0 : i32, i32
  }
  func.func @transform_4(%arg0: i32) -> (i32, i32) {
    %c0_i32 = arith.constant 0 : i32
    %c0_i32_0 = arith.constant 0 : i32
    %c0_i32_1 = arith.constant 0 : i32
    return %c0_i32, %c0_i32_0 : i32, i32
  }
  func.func @transform_5(%arg0: i32) -> (i32, i32, i32) {
    %c0_i32 = arith.constant 0 : i32
    %c0_i32_0 = arith.constant 0 : i32
    %c0_i32_1 = arith.constant 0 : i32
    return %arg0, %c0_i32, %c0_i32_0 : i32, i32, i32
  }
}

</mosaic_0001>

<llo_original>
// kernel: tpu_custom_call.1
$region0: #{tpu_custom_call.1}
  #allocation0 [shape = 'u32[]', space=smem, size = 0x4, offset = 0x4, fixed_abs, tag = 'smem constant byte address 0x4 - core index']
  #allocation1 [shape = 'u32[72,128]{1,0:T(1,128)}', space=vmem, size = 0x9000, scoped, tag = 'internal scratch']
  %s0 = inlined_call_operand.hbm [shape: f32[2,8,32], index: 0, kind: input, shape index: {}]
  %s1 = inlined_call_operand.hbm [shape: f32[32,96], index: 1, kind: input, shape index: {}]
  %s2 = inlined_call_operand.vmem [shape: f32[1,96], index: 2, kind: input, shape index: {}]
  %s3 = inlined_call_operand.hbm [shape: f32[32,32], index: 3, kind: input, shape index: {}]
  %s4 = inlined_call_operand.vmem [shape: f32[1,32], index: 4, kind: input, shape index: {}]
  %s5 = inlined_call_operand.hbm [shape: f32[2,8,32], index: 5, kind: output, shape index: {}]
  %s6 = sld [smem:[#allocation0]]
  $region65: #{tpu_custom_call.1} parent=0
    _
  %s8 = ssub.s32 1, %s6
  %s9 = scalar_select 0, %s8, %s6
  $region1: #{tpu_custom_call.1} parent=0
    #allocation2 [shape = 'u8[8192]{0}', space=vmem, size = 0x2000, scoped, tag = 'input window, operand 0']
    #allocation3 [shape = 's32[2]{0}', space=sflag, size = 0x8, scoped, tag = 'scoped memory for tpu_custom_call.1']
    #allocation4 [shape = 's32[2]{0}', space=sflag, size = 0x8, scoped, tag = 'scoped memory for tpu_custom_call.1']
    #allocation5 [shape = 'u8[16384]{0}', space=vmem, size = 0x4000, scoped, tag = 'input window, operand 1, single buffered']
    #allocation6 [shape = 's32[1]{0}', space=sflag, size = 0x4, scoped, tag = 'scoped memory for tpu_custom_call.1']
    #allocation7 [shape = 'u8[16384]{0}', space=vmem, size = 0x4000, scoped, tag = 'input window, operand 3, single buffered']
    #allocation8 [shape = 'u8[8192]{0}', space=vmem, size = 0x2000, scoped, tag = 'output window, operand 0']
    %10 = vsyncpa [#allocation3], 0
    %s11 = scalar_lea.sflag [#allocation3], 1
    %12 = vsyncpa %s11, 0
    %13 = vsyncpa [#allocation6], 0
    %14 = vsyncpa [#allocation4], 0
    %s15 = scalar_lea.sflag [#allocation4], 1
    %16 = vsyncpa %s15, 0
    loop: start=0, step=1, limit=4
    $region2: #{tpu_custom_call.1} parent=1 // loop_pre_header
      _
    $region3: #{tpu_custom_call.1} parent=1 // loop_header
      %s18 = sphi 0, %s22
      %p19 = scmp.ge.s32.totalorder %s18, 4
      %s28 = sphi 0, %s30
      %s31 = sphi 0, %s28
      %s32 = sphi 0, %s31
      %s48 = sphi 0, %s32
      %s52 = sphi 0, %s52
      %s54 = sphi 0, %s52
      %s55 = sphi 0, %s54
      %s69 = sphi 0, %s55
      %s73 = sphi 0, %s73
      %s75 = sphi 0, %s73
      %s76 = sphi 0, %s75
      %s90 = sphi 0, %s76
      %s94 = sphi 0, %s94
      %s96 = sphi 0, %s94
      %s97 = sphi 0, %s96
      %s111 = sphi 0, %s97
      %s115 = sphi 0, %s115
      %s117 = sphi 0, %s115
      %s118 = sphi 0, %s117
      %s132 = sphi 0, %s118
      %s138 = sphi 0, %s140
      %s141 = sphi 0, %s138
      %s142 = sphi 0, %s141
      %s158 = sphi 0, %s142
    $region4: #{tpu_custom_call.1} parent=1 // loop_header_branch
      %21 = sbr.rel (%p19) target = $region8
    $region5: #{tpu_custom_call.1} parent=1 // loop_body
      %s23 = ssub.s32 %s18, 1
      %s24 = ssub.s32 %s18, 2
      %s25 = sadd.s32 %s18, 1
      %s26 = ssub.s32 %s18, %s25
      %p27 = scmp.eq.s32.totalorder %s26, 0
      %s29 = sadd.s32 %s28, 1
      %s30 = scalar_select %p27, %s28, %s29
      %p33 = pneg %p27
      %p34 = scmp.eq.s32.totalorder %s18, 1
      %p35 = por %p33, %p34
      %p36 = scmp.ne.s32.totalorder %s28, %s31
      %p37 = scmp.eq.s32.totalorder %s18, 0
      %p38 = por %p36, %p37
      %p39 = scmp.ne.s32.totalorder %s28, %s31
      %p40 = scmp.eq.s32.totalorder %s23, 1
      %p41 = por %p39, %p40
      %p42 = scmp.ne.s32.totalorder %s31, %s32
      %p43 = scmp.eq.s32.totalorder %s23, 0
      %p44 = por %p42, %p43
      %p45 = scmp.ne.s32.totalorder %s31, %s32
      %p46 = scmp.eq.s32.totalorder %s24, 1
      %p47 = por %p45, %p46
      %p49 = scmp.ne.s32.totalorder %s32, %s48
      %p50 = scmp.eq.s32.totalorder %s24, 0
      %p51 = por %p49, %p50
      %s53 = sadd.s32 %s52, 1
      %p56 = scmp.eq.s32.totalorder %s18, 1
      %p57 = scmp.ne.s32.totalorder %s52, %s54
      %p58 = scmp.eq.s32.totalorder %s18, 0
      %p59 = por %p57, %p58
      %p60 = scmp.ne.s32.totalorder %s52, %s54
      %p61 = scmp.eq.s32.totalorder %s23, 1
      %p62 = por %p60, %p61
      %p63 = scmp.ne.s32.totalorder %s54, %s55
      %p64 = scmp.eq.s32.totalorder %s23, 0
      %p65 = por %p63, %p64
      %p66 = scmp.ne.s32.totalorder %s54, %s55
      %p67 = scmp.eq.s32.totalorder %s24, 1
      %p68 = por %p66, %p67
      %p70 = scmp.ne.s32.totalorder %s55, %s69
      %p71 = scmp.eq.s32.totalorder %s24, 0
      %p72 = por %p70, %p71
      %s74 = sadd.s32 %s73, 1
      %p77 = scmp.eq.s32.totalorder %s18, 1
      %p78 = scmp.ne.s32.totalorder %s73, %s75
      %p79 = scmp.eq.s32.totalorder %s18, 0
      %p80 = por %p78, %p79
      %p81 = scmp.ne.s32.totalorder %s73, %s75
      %p82 = scmp.eq.s32.totalorder %s23, 1
      %p83 = por %p81, %p82
      %p84 = scmp.ne.s32.totalorder %s75, %s76
      %p85 = scmp.eq.s32.totalorder %s23, 0
      %p86 = por %p84, %p85
      %p87 = scmp.ne.s32.totalorder %s75, %s76
      %p88 = scmp.eq.s32.totalorder %s24, 1
      %p89 = por %p87, %p88
      %p91 = scmp.ne.s32.totalorder %s76, %s90
      %p92 = scmp.eq.s32.totalorder %s24, 0
      %p93 = por %p91, %p92
      %s95 = sadd.s32 %s94, 1
      %p98 = scmp.eq.s32.totalorder %s18, 1
      %p99 = scmp.ne.s32.totalorder %s94, %s96
      %p100 = scmp.eq.s32.totalorder %s18, 0
      %p101 = por %p99, %p100
      %p102 = scmp.ne.s32.totalorder %s94, %s96
      %p103 = scmp.eq.s32.totalorder %s23, 1
      %p104 = por %p102, %p103
      %p105 = scmp.ne.s32.totalorder %s96, %s97
      %p106 = scmp.eq.s32.totalorder %s23, 0
      %p107 = por %p105, %p106
      %p108 = scmp.ne.s32.totalorder %s96, %s97
      %p109 = scmp.eq.s32.totalorder %s24, 1
      %p110 = por %p108, %p109
      %p112 = scmp.ne.s32.totalorder %s97, %s111
      %p113 = scmp.eq.s32.totalorder %s24, 0
      %p114 = por %p112, %p113
      %s116 = sadd.s32 %s115, 1
      %p119 = scmp.eq.s32.totalorder %s18, 1
      %p120 = scmp.ne.s32.totalorder %s115, %s117
      %p121 = scmp.eq.s32.totalorder %s18, 0
      %p122 = por %p120, %p121
      %p123 = scmp.ne.s32.totalorder %s115, %s117
      %p124 = scmp.eq.s32.totalorder %s23, 1
      %p125 = por %p123, %p124
      %p126 = scmp.ne.s32.totalorder %s117, %s118
      %p127 = scmp.eq.s32.totalorder %s23, 0
      %p128 = por %p126, %p127
      %p129 = scmp.ne.s32.totalorder %s117, %s118
      %p130 = scmp.eq.s32.totalorder %s24, 1
      %p131 = por %p129, %p130
      %p133 = scmp.ne.s32.totalorder %s118, %s132
      %p134 = scmp.eq.s32.totalorder %s24, 0
      %p135 = por %p133, %p134
      %s136 = ssub.s32 %s18, %s25
      %p137 = scmp.eq.s32.totalorder %s136, 0
      %s139 = sadd.s32 %s138, 1
      %s140 = scalar_select %p137, %s138, %s139
      %p143 = pneg %p137
      %p144 = scmp.eq.s32.totalorder %s18, 1
      %p145 = por %p143, %p144
      %p146 = scmp.ne.s32.totalorder %s138, %s141
      %p147 = scmp.eq.s32.totalorder %s18, 0
      %p148 = por %p146, %p147
      %p149 = scmp.ne.s32.totalorder %s138, %s141
      %p150 = scmp.eq.s32.totalorder %s23, 1
      %p151 = por %p149, %p150
      %p152 = scmp.ne.s32.totalorder %s141, %s142
      %p153 = scmp.eq.s32.totalorder %s23, 0
      %p154 = por %p152, %p153
      %p155 = scmp.ne.s32.totalorder %s141, %s142
      %p156 = scmp.eq.s32.totalorder %s24, 1
      %p157 = por %p155, %p156
      %p159 = scmp.ne.s32.totalorder %s142, %s158
      %p160 = scmp.eq.s32.totalorder %s24, 0
      %p161 = por %p159, %p160
      %p162 = scmp.le.s32.totalorder 1, %s18
      %p163 = scmp.lt.s32.totalorder %s18, 3
      %p164 = pnand %p162, %p163
      %p165 = pneg %p164
      // Predicated region
      $region9: #{tpu_custom_call.1} parent=5 // pred_check
        _
      $region10: #{tpu_custom_call.1} parent=5 // pred_check_branch
        %167 = sbr.rel (%p164) target = $region12
      $region11: #{tpu_custom_call.1} parent=5 // pred_region
        %s168 = ssub.s32 %s18, 1
        // Predicated region
        $region13: #{tpu_custom_call.1} parent=11 // pred_check
          %p169 = pneg %p65
        $region14: #{tpu_custom_call.1} parent=11 // pred_check_branch
          %171 = sbr.rel (%p169) target = $region16
        $region15: #{tpu_custom_call.1} parent=11 // pred_region
          %173 = vsyncadd [#allocation6], 0
          %s174 = sshll.u32 %s1, 4
          %s175 = int_to_ptr.hbm [resolvable:$true] %s174
          %s176 = sshll.u32 [#allocation5], 4
          %s177 = int_to_ptr.vmem [resolvable:$true] %s176
          %182 = dma.hbm_to_vmem [thread:$0]  %s175, 512, %s177, [#allocation6], 128, 128, 8
        $region16: #{tpu_custom_call.1} parent=11 // pred_fallthru
          _
        // Predicated region
        $region17: #{tpu_custom_call.1} parent=11 // pred_check
          %p183 = pneg %p86
        $region18: #{tpu_custom_call.1} parent=11 // pred_check_branch
          %185 = sbr.rel (%p183) target = $region20
        $region19: #{tpu_custom_call.1} parent=11 // pred_region
          _
        $region20: #{tpu_custom_call.1} parent=11 // pred_fallthru
          _
        // Predicated region
        $region21: #{tpu_custom_call.1} parent=11 // pred_check
          %p186 = pneg %p107
        $region22: #{tpu_custom_call.1} parent=11 // pred_check_branch
          %188 = sbr.rel (%p186) target = $region24
        $region23: #{tpu_custom_call.1} parent=11 // pred_region
          %190 = vsyncadd [#allocation6], 0
          %s191 = sshll.u32 %s3, 4
          %s192 = int_to_ptr.hbm [resolvable:$true] %s191
          %s193 = sshll.u32 [#allocation7], 4
          %s194 = int_to_ptr.vmem [resolvable:$true] %s193
          %199 = dma.hbm_to_vmem [thread:$0]  %s192, 512, %s194, [#allocation6], 128, 128, 8
        $region24: #{tpu_custom_call.1} parent=11 // pred_fallthru
          _
        // Predicated region
        $region25: #{tpu_custom_call.1} parent=11 // pred_check
          %p200 = pneg %p128
        $region26: #{tpu_custom_call.1} parent=11 // pred_check_branch
          %202 = sbr.rel (%p200) target = $region28
        $region27: #{tpu_custom_call.1} parent=11 // pred_region
          _
        $region28: #{tpu_custom_call.1} parent=11 // pred_fallthru
          _
      $region12: #{tpu_custom_call.1} parent=5 // pred_fallthru
        _
      %p203 = scmp.lt.s32.totalorder %s18, 2
      // Predicated region
      $region29: #{tpu_custom_call.1} parent=5 // pred_check
        %p204 = pneg %p203
      $region30: #{tpu_custom_call.1} parent=5 // pred_check_branch
        %206 = sbr.rel (%p204) target = $region32
      $region31: #{tpu_custom_call.1} parent=5 // pred_region
        // Predicated region
        $region33: #{tpu_custom_call.1} parent=31 // pred_check
          %p207 = pneg %p38
        $region34: #{tpu_custom_call.1} parent=31 // pred_check_branch
          %209 = sbr.rel (%p207) target = $region36
        $region35: #{tpu_custom_call.1} parent=31 // pred_region
          %s210 = sand.u32 %s28, 1
          %s211 = scalar_lea.sflag [#allocation3], %s210
          %s212 = sand.u32 %s28, 1
          %s213 = smul.addr %s212, 8
          %s214 = scalar_lea.vmem [#allocation2], %s213
          %216 = vsyncadd %s211, 0
          %s217 = smul.addr %s18, 8
          %s218 = scalar_lea.hbm %s0, %s217
          %s220 = sshll.u32 %s218, 4
          %s221 = int_to_ptr.hbm [resolvable:$true] %s220
          %s222 = sshll.u32 %s214, 4
          %s223 = int_to_ptr.vmem [resolvable:$true] %s222
          %225 = dma.hbm_to_vmem [thread:$0]  %s221, 128, %s223, %s211
        $region36: #{tpu_custom_call.1} parent=31 // pred_fallthru
          _
      $region32: #{tpu_custom_call.1} parent=5 // pred_fallthru
        _
      %p226 = scmp.le.s32.totalorder 1, %s18
      %p227 = scmp.lt.s32.totalorder %s18, 3
      %p228 = pnand %p226, %p227
      %p229 = pneg %p228
      // Predicated region
      $region37: #{tpu_custom_call.1} parent=5 // pred_check
        _
      $region38: #{tpu_custom_call.1} parent=5 // pred_check_branch
        %231 = sbr.rel (%p228) target = $region40
      $region39: #{tpu_custom_call.1} parent=5 // pred_region
        %s232 = ssub.s32 %s18, 1
        %s233 = sand.u32 %s31, 1
        %s234 = scalar_lea.sflag [#allocation3], %s233
        %s235 = sand.u32 %s31, 1
        %s236 = smul.addr %s235, 8
        %s237 = scalar_lea.vmem [#allocation2], %s236
        // Predicated region
        $region41: #{tpu_custom_call.1} parent=39 // pred_check
          %p238 = pneg %p44
        $region42: #{tpu_custom_call.1} parent=39 // pred_check_branch
          %240 = sbr.rel (%p238) target = $region44
        $region43: #{tpu_custom_call.1} parent=39 // pred_region
          %242 = dma.done %s234, 128
        $region44: #{tpu_custom_call.1} parent=39 // pred_fallthru
          _
        // Predicated region
        $region45: #{tpu_custom_call.1} parent=39 // pred_check
          %p243 = pneg %p65
        $region46: #{tpu_custom_call.1} parent=39 // pred_check_branch
          %245 = sbr.rel (%p243) target = $region48
        $region47: #{tpu_custom_call.1} parent=39 // pred_region
          %247 = dma.done [#allocation6], 512
        $region48: #{tpu_custom_call.1} parent=39 // pred_fallthru
          _
        // Predicated region
        $region49: #{tpu_custom_call.1} parent=39 // pred_check
          %p248 = pneg %p107
        $region50: #{tpu_custom_call.1} parent=39 // pred_check_branch
          %250 = sbr.rel (%p248) target = $region52
        $region51: #{tpu_custom_call.1} parent=39 // pred_region
          %252 = dma.done [#allocation6], 512
        $region52: #{tpu_custom_call.1} parent=39 // pred_fallthru
          _
        %s253 = sand.u32 %s31, 1
        %s254 = scalar_lea.sflag [#allocation3], %s253
        %s255 = sand.u32 %s31, 1
        %s256 = smul.addr %s255, 8
        %s257 = scalar_lea.vmem [#allocation2], %s256
        %p258 = pneg %p44
        %p259 = pneg %p41
        %p260 = pneg %p65
        %p261 = pneg %p62
        %p262 = pneg %p86
        %p263 = pneg %p83
        %p264 = pneg %p107
        %p265 = pneg %p104
        %p266 = pneg %p128
        %p267 = pneg %p125
        %p268 = pneg %p154
        %p269 = pneg %p151
        %s270 = sand.u32 %s141, 1
        %s271 = scalar_lea.sflag [#allocation4], %s270
        %s272 = sand.u32 %s141, 1
        %s273 = smul.addr %s272, 8
        %s274 = scalar_lea.vmem [#allocation8], %s273
        %v275 = vld [vmem:[%s237] sm:$0xff]
        %v276 = vld [vmem:[#allocation5] sm:$0xff]
        %v277 = vld [vmem:[#allocation5 + $0x8] sm:$0xff]
        %v278 = vld [vmem:[#allocation5 + $0x10] sm:$0xff]
        %v279 = vld [vmem:[#allocation5 + $0x18] sm:$0xff]
        %v280 = vld [vmem:[%s2] sm:$0x1]
        %v282 = vperm.slane %v280, 0
        %vm284 = vcmask 261120
        %v286 = vsel %vm284, %v275, 0
        %288 = vmatpush.msra.mxu0 0.0
        %289 = vmatpush.msra.mxu0 0.0
        %290 = vmatpush.msra.mxu0 0.0
        %291 = vmatpush.msra.mxu0 0.0
        %292 = vmatpush.msra.mxu0 0.0
        %293 = vmatpush.msra.mxu0 0.0
        %294 = vmatpush.msra.mxu0 0.0
        %295 = vmatpush.msra.mxu0 0.0
        %296 = vmatpush.msra.mxu0 0.0
        %297 = vmatpush.msra.mxu0 0.0
        %298 = vmatpush.msra.mxu0 0.0
        %299 = vmatpush.msra.mxu0 0.0
        %300 = vmatpush.msra.mxu0 %v279
        %301 = vmatpush.msra.mxu0 %v278
        %302 = vmatpush.msra.mxu0 %v277
        %303 = vmatpush.msra.mxu0 %v276
        %304 = vmatmul.f32.gmra.mxu0 %v286
        %v305 = vpop.f32.mrf.mxu0
        %v306 = vadd.f32 %v282, %v305
        %307 = vdwg.mxu0
        %309 = vrot.lane.b32.xlu0 %v306, 120
        %v310 = vpop.permute.xlu0 %309
        %311 = vrot.lane.b32.xlu0 %v306, 112
        %v312 = vpop.permute.xlu0 %311
        %313 = vrot.lane.b32.xlu0 %v306, 104
        %v314 = vpop.permute.xlu0 %313
        %315 = vrot.lane.b32.xlu0 %v306, 96
        %v316 = vpop.permute.xlu0 %315
        %vm317 = vcmask 64512
        %v318 = vsel %vm317, %v306, 0
        %v320 = vsel %vm317, %v316, 0
        %322 = vmatpush.xpose.msra.mxu0 0.0
        %323 = vmatpush.xpose.msra.mxu0 0.0
        %324 = vmatpush.xpose.msra.mxu0 0.0
        %325 = vmatpush.xpose.msra.mxu0 0.0
        %326 = vmatpush.xpose.msra.mxu0 0.0
        %327 = vmatpush.xpose.msra.mxu0 0.0
        %328 = vmatpush.xpose.msra.mxu0 0.0
        %329 = vmatpush.xpose.msra.mxu0 0.0
        %330 = vmatpush.xpose.msra.mxu0 0.0
        %331 = vmatpush.xpose.msra.mxu0 0.0
        %332 = vmatpush.xpose.msra.mxu0 0.0
        %333 = vmatpush.xpose.msra.mxu0 0.0
        %334 = vmatpush.xpose.msra.mxu0 0.0
        %335 = vmatpush.xpose.msra.mxu0 0.0
        %336 = vmatpush.xpose.msra.mxu0 0.0
        %337 = vmatpush.xpose.msra.mxu0 %v320
        %338 = vmatmul.f32.gmra.mxu0 %v318
        %v339 = vpop.f32.mrf.mxu0
        %v340 = vadd.f32 0.0, %v339
        %341 = vdwg.mxu0
        %342 = vrot.lane.b32.xlu0 %v310, 96
        %v343 = vpop.permute.xlu0 %342
        %v344 = vsel %vm317, %v310, 0
        %v346 = vsel %vm317, %v343, 0
        %348 = vmatpush.xpose.msra.mxu0 0.0
        %349 = vmatpush.xpose.msra.mxu0 0.0
        %350 = vmatpush.xpose.msra.mxu0 0.0
        %351 = vmatpush.xpose.msra.mxu0 0.0
        %352 = vmatpush.xpose.msra.mxu0 0.0
        %353 = vmatpush.xpose.msra.mxu0 0.0
        %354 = vmatpush.xpose.msra.mxu0 0.0
        %355 = vmatpush.xpose.msra.mxu0 0.0
        %356 = vmatpush.xpose.msra.mxu0 0.0
        %357 = vmatpush.xpose.msra.mxu0 0.0
        %358 = vmatpush.xpose.msra.mxu0 0.0
        %359 = vmatpush.xpose.msra.mxu0 0.0
        %360 = vmatpush.xpose.msra.mxu0 0.0
        %361 = vmatpush.xpose.msra.mxu0 0.0
        %362 = vmatpush.xpose.msra.mxu0 0.0
        %363 = vmatpush.xpose.msra.mxu0 %v346
        %364 = vmatmul.f32.gmra.mxu0 %v344
        %v365 = vpop.f32.mrf.mxu0
        %v366 = vadd.f32 0.0, %v365
        %367 = vdwg.mxu0
        %368 = vrot.lane.b32.xlu0 %v312, 96
        %v369 = vpop.permute.xlu0 %368
        %v370 = vsel %vm317, %v312, 0
        %v372 = vsel %vm317, %v369, 0
        %374 = vmatpush.xpose.msra.mxu0 0.0
        %375 = vmatpush.xpose.msra.mxu0 0.0
        %376 = vmatpush.xpose.msra.mxu0 0.0
        %377 = vmatpush.xpose.msra.mxu0 0.0
        %378 = vmatpush.xpose.msra.mxu0 0.0
        %379 = vmatpush.xpose.msra.mxu0 0.0
        %380 = vmatpush.xpose.msra.mxu0 0.0
        %381 = vmatpush.xpose.msra.mxu0 0.0
        %382 = vmatpush.xpose.msra.mxu0 0.0
        %383 = vmatpush.xpose.msra.mxu0 0.0
        %384 = vmatpush.xpose.msra.mxu0 0.0
        %385 = vmatpush.xpose.msra.mxu0 0.0
        %386 = vmatpush.xpose.msra.mxu0 0.0
        %387 = vmatpush.xpose.msra.mxu0 0.0
        %388 = vmatpush.xpose.msra.mxu0 0.0
        %389 = vmatpush.xpose.msra.mxu0 %v372
        %390 = vmatmul.f32.gmra.mxu0 %v370
        %v391 = vpop.f32.mrf.mxu0
        %v392 = vadd.f32 0.0, %v391
        %393 = vdwg.mxu0
        %394 = vrot.lane.b32.xlu0 %v314, 96
        %v395 = vpop.permute.xlu0 %394
        %v396 = vsel %vm317, %v314, 0
        %v398 = vsel %vm317, %v395, 0
        %400 = vmatpush.xpose.msra.mxu0 0.0
        %401 = vmatpush.xpose.msra.mxu0 0.0
        %402 = vmatpush.xpose.msra.mxu0 0.0
        %403 = vmatpush.xpose.msra.mxu0 0.0
        %404 = vmatpush.xpose.msra.mxu0 0.0
        %405 = vmatpush.xpose.msra.mxu0 0.0
        %406 = vmatpush.xpose.msra.mxu0 0.0
        %407 = vmatpush.xpose.msra.mxu0 0.0
        %408 = vmatpush.xpose.msra.mxu0 0.0
        %409 = vmatpush.xpose.msra.mxu0 0.0
        %410 = vmatpush.xpose.msra.mxu0 0.0
        %411 = vmatpush.xpose.msra.mxu0 0.0
        %412 = vmatpush.xpose.msra.mxu0 0.0
        %413 = vmatpush.xpose.msra.mxu0 0.0
        %414 = vmatpush.xpose.msra.mxu0 0.0
        %415 = vmatpush.xpose.msra.mxu0 %v398
        %416 = vmatmul.f32.gmra.mxu0 %v396
        %v417 = vpop.f32.mrf.mxu0
        %v418 = vadd.f32 0.0, %v417
        %419 = vdwg.mxu0
        %v420 = vsel %vm317, %v340, -inf
        %421 = vmax.xlane.f32.xlu0 %v420
        %v422 = vpop.xlane.xlu0 %421
        %v423 = vsel %vm317, %v366, -inf
        %424 = vmax.xlane.f32.xlu0 %v423
        %v425 = vpop.xlane.xlu0 %424
        %v426 = vsel %vm317, %v392, -inf
        %427 = vmax.xlane.f32.xlu0 %v426
        %v428 = vpop.xlane.xlu0 %427
        %v429 = vsel %vm317, %v418, -inf
        %430 = vmax.xlane.f32.xlu0 %v429
        %v431 = vpop.xlane.xlu0 %430
        %v432 = vsub.f32 %v340, %v422
        %v433 = vsub.f32 %v366, %v425
        %v434 = vsub.f32 %v392, %v428
        %v435 = vsub.f32 %v418, %v431
        %v436 = vmul.f32 %v432, 1.442695
        %v437 = vpow.pop %v436
        %v438 = vmul.f32 %v433, 1.442695
        %v439 = vpow.pop %v438
        %v440 = vmul.f32 %v434, 1.442695
        %v441 = vpow.pop %v440
        %v442 = vmul.f32 %v435, 1.442695
        %v443 = vpow.pop %v442
        %v444 = vsel %vm317, %v437, 0.0
        %445 = vadd.xlane.f32.xlu0 %v444
        %v446 = vpop.xlane.xlu0 %445
        %v447 = vsel %vm317, %v439, 0.0
        %448 = vadd.xlane.f32.xlu0 %v447
        %v449 = vpop.xlane.xlu0 %448
        %v450 = vsel %vm317, %v441, 0.0
        %451 = vadd.xlane.f32.xlu0 %v450
        %v452 = vpop.xlane.xlu0 %451
        %v453 = vsel %vm317, %v443, 0.0
        %454 = vadd.xlane.f32.xlu0 %v453
        %v455 = vpop.xlane.xlu0 %454
        %v456 = vrcp.pop %v446
        %v457 = vrcp.pop %v449
        %v458 = vrcp.pop %v452
        %v459 = vrcp.pop %v455
        %v460 = vmul.f32 %v437, %v456
        %v461 = vmul.f32 %v439, %v457
        %v462 = vmul.f32 %v441, %v458
        %v463 = vmul.f32 %v443, %v459
        %464 = vrot.lane.b32.xlu0 %v306, 64
        %v465 = vpop.permute.xlu0 %464
        %v468 = vsel %vm317, %v460, 0
        %470 = vmatpush.msra.mxu0 0.0
        %471 = vmatpush.msra.mxu0 0.0
        %472 = vmatpush.msra.mxu0 0.0
        %473 = vmatpush.msra.mxu0 0.0
        %474 = vmatpush.msra.mxu0 0.0
        %475 = vmatpush.msra.mxu0 0.0
        %476 = vmatpush.msra.mxu0 0.0
        %477 = vmatpush.msra.mxu0 0.0
        %478 = vmatpush.msra.mxu0 0.0
        %479 = vmatpush.msra.mxu0 0.0
        %480 = vmatpush.msra.mxu0 0.0
        %481 = vmatpush.msra.mxu0 0.0
        %482 = vmatpush.msra.mxu0 0.0
        %483 = vmatpush.msra.mxu0 0.0
        %484 = vmatpush.msra.mxu0 0.0
        %485 = vmatpush.msra.mxu0 %v465
        %486 = vmatmul.f32.gmra.mxu0 %v468
        %v487 = vpop.f32.mrf.mxu0
        %v488 = vadd.f32 0.0, %v487
        %489 = vdwg.mxu0
        %490 = vrot.lane.b32.xlu0 %v310, 64
        %v491 = vpop.permute.xlu0 %490
        %v494 = vsel %vm317, %v461, 0
        %496 = vmatpush.msra.mxu0 0.0
        %497 = vmatpush.msra.mxu0 0.0
        %498 = vmatpush.msra.mxu0 0.0
        %499 = vmatpush.msra.mxu0 0.0
        %500 = vmatpush.msra.mxu0 0.0
        %501 = vmatpush.msra.mxu0 0.0
        %502 = vmatpush.msra.mxu0 0.0
        %503 = vmatpush.msra.mxu0 0.0
        %504 = vmatpush.msra.mxu0 0.0
        %505 = vmatpush.msra.mxu0 0.0
        %506 = vmatpush.msra.mxu0 0.0
        %507 = vmatpush.msra.mxu0 0.0
        %508 = vmatpush.msra.mxu0 0.0
        %509 = vmatpush.msra.mxu0 0.0
        %510 = vmatpush.msra.mxu0 0.0
        %511 = vmatpush.msra.mxu0 %v491
        %512 = vmatmul.f32.gmra.mxu0 %v494
        %v513 = vpop.f32.mrf.mxu0
        %v514 = vadd.f32 0.0, %v513
        %515 = vdwg.mxu0
        %516 = vrot.lane.b32.xlu0 %v312, 64
        %v517 = vpop.permute.xlu0 %516
        %v520 = vsel %vm317, %v462, 0
        %522 = vmatpush.msra.mxu0 0.0
        %523 = vmatpush.msra.mxu0 0.0
        %524 = vmatpush.msra.mxu0 0.0
        %525 = vmatpush.msra.mxu0 0.0
        %526 = vmatpush.msra.mxu0 0.0
        %527 = vmatpush.msra.mxu0 0.0
        %528 = vmatpush.msra.mxu0 0.0
        %529 = vmatpush.msra.mxu0 0.0
        %530 = vmatpush.msra.mxu0 0.0
        %531 = vmatpush.msra.mxu0 0.0
        %532 = vmatpush.msra.mxu0 0.0
        %533 = vmatpush.msra.mxu0 0.0
        %534 = vmatpush.msra.mxu0 0.0
        %535 = vmatpush.msra.mxu0 0.0
        %536 = vmatpush.msra.mxu0 0.0
        %537 = vmatpush.msra.mxu0 %v517
        %538 = vmatmul.f32.gmra.mxu0 %v520
        %v539 = vpop.f32.mrf.mxu0
        %v540 = vadd.f32 0.0, %v539
        %541 = vdwg.mxu0
        %542 = vrot.lane.b32.xlu0 %v314, 64
        %v543 = vpop.permute.xlu0 %542
        %v546 = vsel %vm317, %v463, 0
        %548 = vmatpush.msra.mxu0 0.0
        %549 = vmatpush.msra.mxu0 0.0
        %550 = vmatpush.msra.mxu0 0.0
        %551 = vmatpush.msra.mxu0 0.0
        %552 = vmatpush.msra.mxu0 0.0
        %553 = vmatpush.msra.mxu0 0.0
        %554 = vmatpush.msra.mxu0 0.0
        %555 = vmatpush.msra.mxu0 0.0
        %556 = vmatpush.msra.mxu0 0.0
        %557 = vmatpush.msra.mxu0 0.0
        %558 = vmatpush.msra.mxu0 0.0
        %559 = vmatpush.msra.mxu0 0.0
        %560 = vmatpush.msra.mxu0 0.0
        %561 = vmatpush.msra.mxu0 0.0
        %562 = vmatpush.msra.mxu0 0.0
        %563 = vmatpush.msra.mxu0 %v543
        %564 = vmatmul.f32.gmra.mxu0 %v546
        %v565 = vpop.f32.mrf.mxu0
        %v566 = vadd.f32 0.0, %v565
        %567 = vdwg.mxu0
        %569 = vrot.lane.b32.xlu0 %v514, 8
        %v570 = vpop.permute.xlu0 %569
        %573 = vrot.lane.b32.xlu0 %v540, 16
        %v574 = vpop.permute.xlu0 %573
        %577 = vrot.lane.b32.xlu0 %v566, 24
        %v578 = vpop.permute.xlu0 %577
        %v580 = vsel %vm317, %v488, %v570
        %vm581 = vcmask 130048
        %v582 = vsel %vm581, %v580, %v574
        %vm583 = vcmask 195584
        %v584 = vsel %vm583, %v582, %v578
        %v585 = vld [vmem:[#allocation7] sm:$0xff]
        %v586 = vld [vmem:[#allocation7 + $0x8] sm:$0xff]
        %v587 = vld [vmem:[#allocation7 + $0x10] sm:$0xff]
        %v588 = vld [vmem:[#allocation7 + $0x18] sm:$0xff]
        %v589 = vld [vmem:[%s4] sm:$0x1]
        %v591 = vperm.slane %v589, 0
        %v594 = vsel %vm284, %v584, 0
        %596 = vmatpush.msra.mxu0 0.0
        %597 = vmatpush.msra.mxu0 0.0
        %598 = vmatpush.msra.mxu0 0.0
        %599 = vmatpush.msra.mxu0 0.0
        %600 = vmatpush.msra.mxu0 0.0
        %601 = vmatpush.msra.mxu0 0.0
        %602 = vmatpush.msra.mxu0 0.0
        %603 = vmatpush.msra.mxu0 0.0
        %604 = vmatpush.msra.mxu0 0.0
        %605 = vmatpush.msra.mxu0 0.0
        %606 = vmatpush.msra.mxu0 0.0
        %607 = vmatpush.msra.mxu0 0.0
        %608 = vmatpush.msra.mxu0 %v588
        %609 = vmatpush.msra.mxu0 %v587
        %610 = vmatpush.msra.mxu0 %v586
        %611 = vmatpush.msra.mxu0 %v585
        %612 = vmatmul.f32.gmra.mxu0 %v594
        %v613 = vpop.f32.mrf.mxu0
        %v614 = vadd.f32 %v591, %v613
        %615 = vdwg.mxu0
        %616 = vst.msk [vmem:[%s274] sm:$0xff] %vm284, %v614
        %s617 = sand.u32 %s141, 1
        %s618 = scalar_lea.sflag [#allocation4], %s617
        %s619 = sand.u32 %s141, 1
        %s620 = smul.addr %s619, 8
        %s621 = scalar_lea.vmem [#allocation8], %s620
        // Predicated region
        $region53: #{tpu_custom_call.1} parent=39 // pred_check
          %p622 = pneg %p151
        $region54: #{tpu_custom_call.1} parent=39 // pred_check_branch
          %624 = sbr.rel (%p622) target = $region56
        $region55: #{tpu_custom_call.1} parent=39 // pred_region
          %626 = vsyncadd %s618, 0
          %s627 = smul.addr %s23, 8
          %s628 = scalar_lea.hbm %s5, %s627
          %s630 = sshll.u32 %s621, 4
          %s631 = int_to_ptr.vmem [resolvable:$true] %s630
          %s632 = sshll.u32 %s628, 4
          %s633 = int_to_ptr.hbm [resolvable:$true] %s632
          %635 = dma.vmem_to_hbm [thread:$0]  %s631, 128, %s633, %s618
        $region56: #{tpu_custom_call.1} parent=39 // pred_fallthru
          _
      $region40: #{tpu_custom_call.1} parent=5 // pred_fallthru
        _
      %p636 = scmp.le.s32.totalorder 2, %s18
      // Predicated region
      $region57: #{tpu_custom_call.1} parent=5 // pred_check
        %p637 = pneg %p636
      $region58: #{tpu_custom_call.1} parent=5 // pred_check_branch
        %639 = sbr.rel (%p637) target = $region60
      $region59: #{tpu_custom_call.1} parent=5 // pred_region
        %s640 = ssub.s32 %s18, 2
        // Predicated region
        $region61: #{tpu_custom_call.1} parent=59 // pred_check
          %p641 = pneg %p157
        $region62: #{tpu_custom_call.1} parent=59 // pred_check_branch
          %643 = sbr.rel (%p641) target = $region64
        $region63: #{tpu_custom_call.1} parent=59 // pred_region
          %s644 = sand.u32 %s142, 1
          %s645 = scalar_lea.sflag [#allocation4], %s644
          %s646 = sand.u32 %s142, 1
          %s647 = smul.addr %s646, 8
          %s648 = scalar_lea.vmem [#allocation8], %s647
          %650 = dma.done %s645, 128
        $region64: #{tpu_custom_call.1} parent=59 // pred_fallthru
          _
      $region60: #{tpu_custom_call.1} parent=5 // pred_fallthru
        _
    $region6: #{tpu_custom_call.1} parent=1 // loop_footer
      %s22 = sadd.s32 1, %s18
    $region7: #{tpu_custom_call.1} parent=1 // loop_footer_branch
      %17 = sbr.rel target = $region3
    $region8: #{tpu_custom_call.1} parent=1 // loop_exit
      _
    %651 = vsyncpa [#allocation3], 1
    %s652 = scalar_lea.sflag [#allocation3], 1
    %653 = vsyncpa %s652, 1
    %654 = vsyncpa [#allocation6], 1
    %655 = vsyncpa [#allocation4], 1
    %s656 = scalar_lea.sflag [#allocation4], 1
    %657 = vsyncpa %s656, 1

</llo_original>
